<compile_context>
chip_gen: v6e
topology: v6e:2x2x1
jax: 0.10.0
libtpu: 0.0.40
codegen_flags: <defaults>
</compile_context>

<pallas_src>
import functools

import jax
import jax.numpy as jnp
from jax.experimental import pallas as pl
from jax.experimental.pallas import tpu as pltpu

H1, H2 = 250, 100        # PyTorch hidden sizes
H1P, H2P = 256, 128      # lane-padded hidden sizes (zero-padded, math unchanged)
AP = 128                 # lane-padded output width (a_size <= 128)


def _reward_net_kernel(x_ref, w1_ref, b1_ref, w2_ref, b2_ref, w3_ref, b3_ref,
                       out_ref, *, inv_temp):
    """Fused 3-layer MLP on one (TB, x_size) batch tile; weights stay resident."""
    # Layer 1: (TB, x_size) @ (x_size, 256)  -- bf16 MXU, f32 accumulate.
    h1 = jnp.dot(x_ref[...], w1_ref[...], preferred_element_type=jnp.float32)
    h1 = jnp.maximum(h1 + b1_ref[...], 0.0).astype(jnp.bfloat16)

    # Layer 2: (TB, 256) @ (256, 128)
    h2 = jnp.dot(h1, w2_ref[...], preferred_element_type=jnp.float32)
    h2 = jnp.maximum(h2 + b2_ref[...], 0.0).astype(jnp.bfloat16)

    # Layer 3: (TB, 128) @ (128, 128)   (a_size lane-padded to 128)
    logits = jnp.dot(h2, w3_ref[...], preferred_element_type=jnp.float32) + b3_ref[...]

    # sigmoid(logits / temp): EUP exp + approx reciprocal (EUP slot is idle here).
    z = logits * inv_temp
    out_ref[...] = pl.reciprocal(1.0 + jnp.exp(-z), approx=True).astype(out_ref.dtype)


def prepare_params(params, *, x_size):
    """One-time prep: transpose PyTorch (out,in) weights to (in,out), zero-pad
    to lane-friendly sizes, cast weights to bf16 (biases stay f32)."""
    def pad_t(w, rows, cols):
        wt = jnp.asarray(w, jnp.float32).T                      # (in, out)
        full = jnp.zeros((rows, cols), jnp.float32)
        full = full.at[: wt.shape[0], : wt.shape[1]].set(wt)
        return full.astype(jnp.bfloat16)

    def pad_b(b, cols):
        bb = jnp.asarray(b, jnp.float32)
        full = jnp.zeros((1, cols), jnp.float32)
        return full.at[0, : bb.shape[0]].set(bb)

    return {
        "w1": pad_t(params["w1"], x_size, H1P),
        "b1": pad_b(params["b1"], H1P),
        "w2": pad_t(params["w2"], H1P, H2P),
        "b2": pad_b(params["b2"], H2P),
        "w3": pad_t(params["w3"], H2P, AP),
        "b3": pad_b(params["b3"], AP),
    }


def reward_net_forward(x, prep, *, x_size, a_size, temp=1.0, block_batch=1024):
    """Flattens input like x.view(-1, x_size) and runs the batch-tiled kernel."""
    x2d = jnp.asarray(x, jnp.float32).reshape(-1, x_size).astype(jnp.bfloat16)
    batch = x2d.shape[0]

    # Batch tile: multiple of 8 sublanes, capped at block_batch (VMEM budget
    # at TB=1024 is well under the 32 MiB scoped limit on all generations).
    tb = min(block_batch, max(8, ((batch + 7) // 8) * 8))
    pb = pl.cdiv(batch, tb) * tb
    if pb != batch:
        x2d = jnp.pad(x2d, ((0, pb - batch), (0, 0)))

    kernel = functools.partial(_reward_net_kernel, inv_temp=1.0 / float(temp))
    resident = lambda i: (0, 0)   # weights/biases: same block every grid step

    out = pl.pallas_call(
        kernel,
        out_shape=jax.ShapeDtypeStruct((pb, AP), jnp.float32),
        grid=(pb // tb,),
        in_specs=[
            pl.BlockSpec((tb, x_size), lambda i: (i, 0)),   # x tile
            pl.BlockSpec((x_size, H1P), resident),          # w1
            pl.BlockSpec((1, H1P), resident),               # b1
            pl.BlockSpec((H1P, H2P), resident),             # w2
            pl.BlockSpec((1, H2P), resident),               # b2
            pl.BlockSpec((H2P, AP), resident),              # w3
            pl.BlockSpec((1, AP), resident),                # b3
        ],
        out_specs=pl.BlockSpec((tb, AP), lambda i: (i, 0)),
        compiler_params=pltpu.CompilerParams(
            dimension_semantics=("parallel",),              # megacore on v7x
            vmem_limit_bytes=32 * 1024 * 1024,
        ),
    )(x2d, prep["w1"], prep["b1"], prep["w2"], prep["b2"], prep["w3"], prep["b3"])

    return out[:batch, :a_size]


def init_params(key, x_size, a_size):
    """Deterministic synthetic init mimicking nn.Linear default (uniform +-1/sqrt(fan_in))."""
    ks = jax.random.split(key, 6)

    def lin(kw, kb, fan_in, fan_out):
        bound = 1.0 / jnp.sqrt(fan_in)
        w = jax.random.uniform(kw, (fan_out, fan_in), jnp.float32, -bound, bound)
        b = jax.random.uniform(kb, (fan_out,), jnp.float32, -bound, bound)
        return w, b

    w1, b1 = lin(ks[0], ks[1], x_size, H1)
    w2, b2 = lin(ks[2], ks[3], H1, H2)
    w3, b3 = lin(ks[4], ks[5], H2, a_size)
    return {"w1": w1, "b1": b1, "w2": w2, "b2": b2, "w3": w3, "b3": b3}


if __name__ == "__main__":
    key = jax.random.PRNGKey(0)
    k_in, k_par = jax.random.split(key)

    x_size = 64
    a_size = 8
    batch = 4

    # Input given as (batch, 8, 8); forward flattens it to (-1, x_size) like the module does.
    x = jax.random.normal(k_in, (batch, 8, 8), jnp.float32)
    params = init_params(k_par, x_size, a_size)
    prep = prepare_params(params, x_size=x_size)   # one-time param prep (no per-call transposes)

    out = reward_net_forward(x, prep, x_size=x_size, a_size=a_size, temp=1.0)
    out = jax.block_until_ready(out)

    # Sanity check against a pure-JAX f32 reference of the same math.
    x2d = x.reshape(-1, x_size)
    h1 = jnp.maximum(x2d @ params["w1"].T + params["b1"], 0.0)
    h2 = jnp.maximum(h1 @ params["w2"].T + params["b2"], 0.0)
    ref = jax.nn.sigmoid(h2 @ params["w3"].T + params["b3"])
    assert out.shape == (batch, a_size)
    # bf16 MXU inputs + approx reciprocal -> loosened tolerance vs pure-f32 ref.
    assert jnp.allclose(out, ref, atol=2e-2, rtol=0.0), float(jnp.max(jnp.abs(out - ref)))

    print("KERNEL_OK")
</pallas_src>

<mosaic_0001>
module attributes {stable_mosaic.version = 11 : i64} {
  func.func @_reward_net_kernel(%arg0: i32, %arg1: memref<8x64xbf16, #tpu.memory_space<vmem>>, %arg2: memref<64x256xbf16, #tpu.memory_space<vmem>>, %arg3: memref<1x256xf32, #tpu.memory_space<vmem>>, %arg4: memref<256x128xbf16, #tpu.memory_space<vmem>>, %arg5: memref<1x128xf32, #tpu.memory_space<vmem>>, %arg6: memref<128x128xbf16, #tpu.memory_space<vmem>>, %arg7: memref<1x128xf32, #tpu.memory_space<vmem>>, %arg8: memref<8x128xf32, #tpu.memory_space<vmem>>) attributes {dimension_semantics = [#tpu.dimension_semantics<parallel>], iteration_bounds = array<i64: 1>, scalar_prefetch = 0 : i64, scratch_operands = 0 : i64, tpu.core_type = #tpu.core_type<tc>, window_params = [{transform_indices = @transform_0, window_bounds = array<i64: 8, 64>}, {pipeline_mode = #tpu.pipeline_mode<synchronous>, transform_indices = @transform_1, window_bounds = array<i64: 64, 256>}, {pipeline_mode = #tpu.pipeline_mode<synchronous>, transform_indices = @transform_2, window_bounds = array<i64: 1, 256>}, {pipeline_mode = #tpu.pipeline_mode<synchronous>, transform_indices = @transform_3, window_bounds = array<i64: 256, 128>}, {pipeline_mode = #tpu.pipeline_mode<synchronous>, transform_indices = @transform_4, window_bounds = array<i64: 1, 128>}, {pipeline_mode = #tpu.pipeline_mode<synchronous>, transform_indices = @transform_5, window_bounds = array<i64: 128, 128>}, {pipeline_mode = #tpu.pipeline_mode<synchronous>, transform_indices = @transform_6, window_bounds = array<i64: 1, 128>}, {transform_indices = @transform_7, window_bounds = array<i64: 8, 128>}]} {
    %c0 = arith.constant 0 : index
    %c0_0 = arith.constant 0 : index
    %0 = vector.load %arg1[%c0, %c0_0] : memref<8x64xbf16, #tpu.memory_space<vmem>>, vector<8x64xbf16>
    %c0_1 = arith.constant 0 : index
    %c0_2 = arith.constant 0 : index
    %1 = vector.load %arg2[%c0_1, %c0_2] : memref<64x256xbf16, #tpu.memory_space<vmem>>, vector<64x256xbf16>
    %cst = arith.constant dense<0.000000e+00> : vector<8x256xf32>
    %2 = tpu.matmul %0, %1, %cst {dimension_numbers = #tpu.dot_dimension_numbers<[1], [0], [0], [1], [0, 0, 1, 1], [], []>} : vector<8x64xbf16>, vector<64x256xbf16>, vector<8x256xf32> -> vector<8x256xf32>
    %c0_3 = arith.constant 0 : index
    %c0_4 = arith.constant 0 : index
    %3 = vector.load %arg3[%c0_3, %c0_4] : memref<1x256xf32, #tpu.memory_space<vmem>>, vector<1x256xf32>
    %4 = vector.broadcast %3 : vector<1x256xf32> to vector<8x256xf32>
    %5 = arith.addf %2, %4 : vector<8x256xf32>
    %cst_5 = arith.constant 0.000000e+00 : f32
    %6 = vector.broadcast %cst_5 : f32 to vector<8x256xf32>
    %7 = arith.maximumf %5, %6 : vector<8x256xf32>
    %8 = arith.truncf %7 : vector<8x256xf32> to vector<8x256xbf16>
    %c0_6 = arith.constant 0 : index
    %c0_7 = arith.constant 0 : index
    %9 = vector.load %arg4[%c0_6, %c0_7] : memref<256x128xbf16, #tpu.memory_space<vmem>>, vector<256x128xbf16>
    %cst_8 = arith.constant dense<0.000000e+00> : vector<8x128xf32>
    %10 = tpu.matmul %8, %9, %cst_8 {dimension_numbers = #tpu.dot_dimension_numbers<[1], [0], [0], [1], [0, 0, 1, 1], [], []>} : vector<8x256xbf16>, vector<256x128xbf16>, vector<8x128xf32> -> vector<8x128xf32>
    %c0_9 = arith.constant 0 : index
    %c0_10 = arith.constant 0 : index
    %11 = vector.load %arg5[%c0_9, %c0_10] : memref<1x128xf32, #tpu.memory_space<vmem>>, vector<1x128xf32>
    %12 = vector.broadcast %11 : vector<1x128xf32> to vector<8x128xf32>
    %13 = arith.addf %10, %12 : vector<8x128xf32>
    %cst_11 = arith.constant 0.000000e+00 : f32
    %14 = vector.broadcast %cst_11 : f32 to vector<8x128xf32>
    %15 = arith.maximumf %13, %14 : vector<8x128xf32>
    %16 = arith.truncf %15 : vector<8x128xf32> to vector<8x128xbf16>
    %c0_12 = arith.constant 0 : index
    %c0_13 = arith.constant 0 : index
    %17 = vector.load %arg6[%c0_12, %c0_13] : memref<128x128xbf16, #tpu.memory_space<vmem>>, vector<128x128xbf16>
    %cst_14 = arith.constant dense<0.000000e+00> : vector<8x128xf32>
    %18 = tpu.matmul %16, %17, %cst_14 {dimension_numbers = #tpu.dot_dimension_numbers<[1], [0], [0], [1], [0, 0, 1, 1], [], []>} : vector<8x128xbf16>, vector<128x128xbf16>, vector<8x128xf32> -> vector<8x128xf32>
    %c0_15 = arith.constant 0 : index
    %c0_16 = arith.constant 0 : index
    %19 = vector.load %arg7[%c0_15, %c0_16] : memref<1x128xf32, #tpu.memory_space<vmem>>, vector<1x128xf32>
    %20 = vector.broadcast %19 : vector<1x128xf32> to vector<8x128xf32>
    %21 = arith.addf %18, %20 : vector<8x128xf32>
    %cst_17 = arith.constant 1.000000e+00 : f32
    %22 = vector.broadcast %cst_17 : f32 to vector<8x128xf32>
    %23 = arith.mulf %21, %22 : vector<8x128xf32>
    %cst_18 = arith.constant 0.000000e+00 : f32
    %24 = vector.broadcast %cst_18 : f32 to vector<8x128xf32>
    %25 = arith.subf %24, %23 : vector<8x128xf32>
    %26 = math.exp %25 : vector<8x128xf32>
    %cst_19 = arith.constant 1.000000e+00 : f32
    %27 = vector.broadcast %cst_19 : f32 to vector<8x128xf32>
    %28 = arith.addf %27, %26 : vector<8x128xf32>
    %29 = tpu.reciprocal %28 {approx = true} : vector<8x128xf32> -> vector<8x128xf32>
    %c0_20 = arith.constant 0 : index
    %c0_21 = arith.constant 0 : index
    %30 = vector.load %arg8[%c0_20, %c0_21] : memref<8x128xf32, #tpu.memory_space<vmem>>, vector<8x128xf32>
    tpu.vector_store %arg8[%c0_20, %c0_21], %29 {strides = array<i32>} : memref<8x128xf32, #tpu.memory_space<vmem>>, vector<8x128xf32>,
    return
  }
  func.func @transform_0(%arg0: i32) -> (i32, i32) {
    %c0_i32 = arith.constant 0 : i32
    %c0_i32_0 = arith.constant 0 : i32
    return %arg0, %c0_i32 : i32, i32
  }
  func.func @transform_1(%arg0: i32) -> (i32, i32) {
    %c0_i32 = arith.constant 0 : i32
    %c0_i32_0 = arith.constant 0 : i32
    %c0_i32_1 = arith.constant 0 : i32
    return %c0_i32, %c0_i32_0 : i32, i32
  }
  func.func @transform_2(%arg0: i32) -> (i32, i32) {
    %c0_i32 = arith.constant 0 : i32
    %c0_i32_0 = arith.constant 0 : i32
    %c0_i32_1 = arith.constant 0 : i32
    return %c0_i32, %c0_i32_0 : i32, i32
  }
  func.func @transform_3(%arg0: i32) -> (i32, i32) {
    %c0_i32 = arith.constant 0 : i32
    %c0_i32_0 = arith.constant 0 : i32
    %c0_i32_1 = arith.constant 0 : i32
    return %c0_i32, %c0_i32_0 : i32, i32
  }
  func.func @transform_4(%arg0: i32) -> (i32, i32) {
    %c0_i32 = arith.constant 0 : i32
    %c0_i32_0 = arith.constant 0 : i32
    %c0_i32_1 = arith.constant 0 : i32
    return %c0_i32, %c0_i32_0 : i32, i32
  }
  func.func @transform_5(%arg0: i32) -> (i32, i32) {
    %c0_i32 = arith.constant 0 : i32
    %c0_i32_0 = arith.constant 0 : i32
    %c0_i32_1 = arith.constant 0 : i32
    return %c0_i32, %c0_i32_0 : i32, i32
  }
  func.func @transform_6(%arg0: i32) -> (i32, i32) {
    %c0_i32 = arith.constant 0 : i32
    %c0_i32_0 = arith.constant 0 : i32
    %c0_i32_1 = arith.constant 0 : i32
    return %c0_i32, %c0_i32_0 : i32, i32
  }
  func.func @transform_7(%arg0: i32) -> (i32, i32) {
    %c0_i32 = arith.constant 0 : i32
    %c0_i32_0 = arith.constant 0 : i32
    return %arg0, %c0_i32 : i32, i32
  }
}

</mosaic_0001>

<llo_original>
// kernel: tpu_custom_call.1
$region0: #{tpu_custom_call.1}
  #allocation0 [shape = 'u32[]', space=smem, size = 0x4, offset = 0x4, fixed_abs, tag = 'smem constant byte address 0x4 - core index']
  #allocation1 [shape = 'u32[144,128]{1,0:T(1,128)}', space=vmem, size = 0x12000, scoped, tag = 'internal scratch']
  %s0 = inlined_call_operand.hbm [shape: bf16[8,64], index: 0, kind: input, shape index: {}]
  %s1 = inlined_call_operand.hbm [shape: bf16[64,256], index: 1, kind: input, shape index: {}]
  %s2 = inlined_call_operand.vmem [shape: f32[1,256], index: 2, kind: input, shape index: {}]
  %s3 = inlined_call_operand.hbm [shape: bf16[256,128], index: 3, kind: input, shape index: {}]
  %s4 = inlined_call_operand.vmem [shape: f32[1,128], index: 4, kind: input, shape index: {}]
  %s5 = inlined_call_operand.hbm [shape: bf16[128,128], index: 5, kind: input, shape index: {}]
  %s6 = inlined_call_operand.vmem [shape: f32[1,128], index: 6, kind: input, shape index: {}]
  %s7 = inlined_call_operand.hbm [shape: f32[8,128], index: 7, kind: output, shape index: {}]
  %s8 = sld [smem:[#allocation0]]
  $region54: #{tpu_custom_call.1} parent=0
    _
  %s10 = ssub.s32 1, %s8
  %s11 = scalar_select 0, %s10, %s8
  $region1: #{tpu_custom_call.1} parent=0
    #allocation2 [shape = 'u8[2048]{0}', space=vmem, size = 0x800, scoped, tag = 'input window, operand 0, single buffered']
    #allocation3 [shape = 's32[1]{0}', space=sflag, size = 0x4, scoped, tag = 'scoped memory for tpu_custom_call.1']
    #allocation4 [shape = 's32[1]{0}', space=sflag, size = 0x4, scoped, tag = 'scoped memory for tpu_custom_call.1']
    #allocation5 [shape = 'u8[32768]{0}', space=vmem, size = 0x8000, scoped, tag = 'input window, operand 1, single buffered']
    #allocation6 [shape = 's32[1]{0}', space=sflag, size = 0x4, scoped, tag = 'scoped memory for tpu_custom_call.1']
    #allocation7 [shape = 'u8[65536]{0}', space=vmem, size = 0x10000, scoped, tag = 'input window, operand 3, single buffered']
    #allocation8 [shape = 'u8[32768]{0}', space=vmem, size = 0x8000, scoped, tag = 'input window, operand 5, single buffered']
    #allocation9 [shape = 's32[1]{0}', space=sflag, size = 0x4, scoped, tag = 'scoped memory for tpu_custom_call.1']
    #allocation10 [shape = 'u8[4096]{0}', space=vmem, size = 0x1000, scoped, tag = 'output window, operand 0, single buffered']
    %12 = vsyncpa [#allocation3], 0
    %13 = vsyncpa [#allocation6], 0
    %14 = vsyncpa [#allocation9], 0
    %15 = vsyncpa [#allocation4], 0
    // Predicated region
    $region2: #{tpu_custom_call.1} parent=1 // pred_check
      _
    $region3: #{tpu_custom_call.1} parent=1 // pred_check_branch
      %17 = sbr.rel (0) target = $region5
    $region4: #{tpu_custom_call.1} parent=1 // pred_region
      %s19 = ssub.s32 64, 64
      %20 = vsyncadd [#allocation3], %s19
      %s22 = sshll.u32 [#allocation2], 4
      %s23 = int_to_ptr.vmem [resolvable:$true] %s22
      %25 = dma.hbm_to_vmem [thread:$0]  %s0, 64, %s23, [#allocation3]
    $region5: #{tpu_custom_call.1} parent=1 // pred_fallthru
      _
    // Predicated region
    $region6: #{tpu_custom_call.1} parent=1 // pred_check
      _
    $region7: #{tpu_custom_call.1} parent=1 // pred_check_branch
      %27 = sbr.rel (0) target = $region9
    $region8: #{tpu_custom_call.1} parent=1 // pred_region
      %s29 = ssub.s32 1024, 1024
      %30 = vsyncadd [#allocation6], %s29
      %s31 = sshll.u32 [#allocation5], 4
      %s32 = int_to_ptr.vmem [resolvable:$true] %s31
      %37 = dma.hbm_to_vmem [thread:$0]  %s1, 1024, %s32, [#allocation6], 128, 128, 8
    $region9: #{tpu_custom_call.1} parent=1 // pred_fallthru
      _
    // Predicated region
    $region10: #{tpu_custom_call.1} parent=1 // pred_check
      _
    $region11: #{tpu_custom_call.1} parent=1 // pred_check_branch
      %39 = sbr.rel (0) target = $region13
    $region12: #{tpu_custom_call.1} parent=1 // pred_region
      _
    $region13: #{tpu_custom_call.1} parent=1 // pred_fallthru
      _
    // Predicated region
    $region14: #{tpu_custom_call.1} parent=1 // pred_check
      _
    $region15: #{tpu_custom_call.1} parent=1 // pred_check_branch
      %41 = sbr.rel (0) target = $region17
    $region16: #{tpu_custom_call.1} parent=1 // pred_region
      %s43 = ssub.s32 2048, 2048
      %44 = vsyncadd [#allocation6], %s43
      %s45 = sshll.u32 [#allocation7], 4
      %s46 = int_to_ptr.vmem [resolvable:$true] %s45
      %51 = dma.hbm_to_vmem [thread:$0]  %s3, 2048, %s46, [#allocation6], 64, 64, 4
    $region17: #{tpu_custom_call.1} parent=1 // pred_fallthru
      _
    // Predicated region
    $region18: #{tpu_custom_call.1} parent=1 // pred_check
      _
    $region19: #{tpu_custom_call.1} parent=1 // pred_check_branch
      %53 = sbr.rel (0) target = $region21
    $region20: #{tpu_custom_call.1} parent=1 // pred_region
      _
    $region21: #{tpu_custom_call.1} parent=1 // pred_fallthru
      _
    // Predicated region
    $region22: #{tpu_custom_call.1} parent=1 // pred_check
      _
    $region23: #{tpu_custom_call.1} parent=1 // pred_check_branch
      %55 = sbr.rel (0) target = $region25
    $region24: #{tpu_custom_call.1} parent=1 // pred_region
      %s57 = ssub.s32 1024, 1024
      %58 = vsyncadd [#allocation9], %s57
      %s59 = sshll.u32 [#allocation8], 4
      %s60 = int_to_ptr.vmem [resolvable:$true] %s59
      %65 = dma.hbm_to_vmem [thread:$0]  %s5, 1024, %s60, [#allocation9], 64, 64, 4
    $region25: #{tpu_custom_call.1} parent=1 // pred_fallthru
      _
    // Predicated region
    $region26: #{tpu_custom_call.1} parent=1 // pred_check
      _
    $region27: #{tpu_custom_call.1} parent=1 // pred_check_branch
      %67 = sbr.rel (0) target = $region29
    $region28: #{tpu_custom_call.1} parent=1 // pred_region
      _
    $region29: #{tpu_custom_call.1} parent=1 // pred_fallthru
      _
    // Predicated region
    $region30: #{tpu_custom_call.1} parent=1 // pred_check
      _
    $region31: #{tpu_custom_call.1} parent=1 // pred_check_branch
      %69 = sbr.rel (0) target = $region33
    $region32: #{tpu_custom_call.1} parent=1 // pred_region
      %70 = dma.done [#allocation3], 64
    $region33: #{tpu_custom_call.1} parent=1 // pred_fallthru
      _
    // Predicated region
    $region34: #{tpu_custom_call.1} parent=1 // pred_check
      _
    $region35: #{tpu_custom_call.1} parent=1 // pred_check_branch
      %72 = sbr.rel (0) target = $region37
    $region36: #{tpu_custom_call.1} parent=1 // pred_region
      %73 = dma.done [#allocation6], 1024
    $region37: #{tpu_custom_call.1} parent=1 // pred_fallthru
      _
    // Predicated region
    $region38: #{tpu_custom_call.1} parent=1 // pred_check
      _
    $region39: #{tpu_custom_call.1} parent=1 // pred_check_branch
      %75 = sbr.rel (0) target = $region41
    $region40: #{tpu_custom_call.1} parent=1 // pred_region
      %76 = dma.done [#allocation6], 2048
    $region41: #{tpu_custom_call.1} parent=1 // pred_fallthru
      _
    // Predicated region
    $region42: #{tpu_custom_call.1} parent=1 // pred_check
      _
    $region43: #{tpu_custom_call.1} parent=1 // pred_check_branch
      %78 = sbr.rel (0) target = $region45
    $region44: #{tpu_custom_call.1} parent=1 // pred_region
      %79 = dma.done [#allocation9], 1024
    $region45: #{tpu_custom_call.1} parent=1 // pred_fallthru
      _
    %v81 = vld [vmem:[#allocation2] sm:$0xf]
    %v82 = vld [vmem:[#allocation5] sm:$0xff]
    %v83 = vld [vmem:[#allocation5 + $0x8] sm:$0xff]
    %v84 = vld [vmem:[#allocation5 + $0x10] sm:$0xff]
    %v85 = vld [vmem:[#allocation5 + $0x18] sm:$0xff]
    %v86 = vld [vmem:[#allocation5 + $0x20] sm:$0xff]
    %v87 = vld [vmem:[#allocation5 + $0x28] sm:$0xff]
    %v88 = vld [vmem:[#allocation5 + $0x30] sm:$0xff]
    %v89 = vld [vmem:[#allocation5 + $0x38] sm:$0xff]
    %v90 = vld [vmem:[%s2] sm:$0x3]
    %v92 = vlaneseq
    %v93 = vshrl.u32 %v92, 7
    %v94 = vsub.s32 0, %v93
    %v95 = vrot.slane %v90, %v94
    %v96 = vlaneseq
    %v97 = vshrl.u32 %v96, 7
    %v98 = vsub.s32 1, %v97
    %v99 = vrot.slane %v90, %v98
    %v110 = vunpack.c.l.b16 %v82
    %v111 = vunpack.c.h.b16 %v82
    %v112 = vunpack.c.l.b16 %v83
    %v113 = vunpack.c.h.b16 %v83
    %v114 = vunpack.c.l.b16 %v84
    %v115 = vunpack.c.h.b16 %v84
    %v116 = vunpack.c.l.b16 %v85
    %v117 = vunpack.c.h.b16 %v85
    %v118 = vunpack.c.l.b16 %v86
    %v119 = vunpack.c.h.b16 %v86
    %v120 = vunpack.c.l.b16 %v87
    %v121 = vunpack.c.h.b16 %v87
    %v122 = vunpack.c.l.b16 %v88
    %v123 = vunpack.c.h.b16 %v88
    %v124 = vunpack.c.l.b16 %v89
    %v125 = vunpack.c.h.b16 %v89
    %v126 = vpack.c.b16 %v112, %v110
    %v127 = vpack.c.b16 %v113, %v111
    %v128 = vpack.c.b16 %v116, %v114
    %v129 = vpack.c.b16 %v117, %v115
    %v130 = vpack.c.b16 %v120, %v118
    %v131 = vpack.c.b16 %v121, %v119
    %v132 = vpack.c.b16 %v124, %v122
    %v133 = vpack.c.b16 %v125, %v123
    %vm142 = vcmask 523264
    %v144 = vsel %vm142, %v81, 0
    %146 = vmatprep.subr.bf16.mxu0 0
    %147 = vmatpush1.bf16.msra.mxu0 0
    %148 = vmatprep.subr.bf16.mxu0 0
    %149 = vmatpush1.bf16.msra.mxu0 0
    %150 = vmatprep.subr.bf16.mxu0 0
    %151 = vmatpush1.bf16.msra.mxu0 0
    %152 = vmatprep.subr.bf16.mxu0 0
    %153 = vmatpush1.bf16.msra.mxu0 0
    %154 = vmatprep.subr.bf16.mxu0 %v133
    %155 = vmatpush1.bf16.msra.mxu0 %v132
    %156 = vmatprep.subr.bf16.mxu0 %v131
    %157 = vmatpush1.bf16.msra.mxu0 %v130
    %158 = vmatprep.subr.bf16.mxu0 %v129
    %159 = vmatpush1.bf16.msra.mxu0 %v128
    %160 = vmatprep.subr.bf16.mxu0 %v127
    %161 = vmatpush1.bf16.msra.mxu0 %v126
    %162 = vmatprep.subr.bf16.mxu0 0
    %163 = vmatpush2.bf16.msra.mxu0 0
    %164 = vmatprep.subr.bf16.mxu0 0
    %165 = vmatpush2.bf16.msra.mxu0 0
    %166 = vmatprep.subr.bf16.mxu0 0
    %167 = vmatpush2.bf16.msra.mxu0 0
    %168 = vmatprep.subr.bf16.mxu0 0
    %169 = vmatpush2.bf16.msra.mxu0 0
    %170 = vmatprep.subr.bf16.mxu0 0
    %171 = vmatpush2.bf16.msra.mxu0 0
    %172 = vmatprep.subr.bf16.mxu0 0
    %173 = vmatpush2.bf16.msra.mxu0 0
    %174 = vmatprep.subr.bf16.mxu0 0
    %175 = vmatpush2.bf16.msra.mxu0 0
    %176 = vmatprep.subr.bf16.mxu0 0
    %177 = vmatpush2.bf16.msra.mxu0 0
    %178 = vmatprep.mubr.bf16.mxu0 0
    %179 = vmatmul.mubr.bf16.gmra.mxu0 %v144
    %v180 = vpop.f32.mrf.mxu0
    %v181 = vadd.f32 %v95, %v180
    %v182 = vpop.f32.mrf.mxu0
    %v183 = vadd.f32 %v99, %v182
    %v184 = vpop.f32.mrf.mxu0
    %v185 = vpop.f32.mrf.mxu0
    %186 = vdwg.mxu0
    %v187 = vmax.f32 %v181, 0.0
    %v188 = vmax.f32 %v183, 0.0
    %v189 = vpack.c.bf16 %v187, %v187
    %v190 = vpack.c.bf16 %v188, %v188
    %v191 = vld [vmem:[#allocation7] sm:$0xf]
    %v192 = vld [vmem:[#allocation7 + $0x4] sm:$0xf]
    %v193 = vld [vmem:[#allocation7 + $0x8] sm:$0xf]
    %v194 = vld [vmem:[#allocation7 + $0xc] sm:$0xf]
    %v195 = vld [vmem:[#allocation7 + $0x10] sm:$0xf]
    %v196 = vld [vmem:[#allocation7 + $0x14] sm:$0xf]
    %v197 = vld [vmem:[#allocation7 + $0x18] sm:$0xf]
    %v198 = vld [vmem:[#allocation7 + $0x1c] sm:$0xf]
    %v199 = vld [vmem:[#allocation7 + $0x20] sm:$0xf]
    %v200 = vld [vmem:[#allocation7 + $0x24] sm:$0xf]
    %v201 = vld [vmem:[#allocation7 + $0x28] sm:$0xf]
    %v202 = vld [vmem:[#allocation7 + $0x2c] sm:$0xf]
    %v203 = vld [vmem:[#allocation7 + $0x30] sm:$0xf]
    %v204 = vld [vmem:[#allocation7 + $0x34] sm:$0xf]
    %v205 = vld [vmem:[#allocation7 + $0x38] sm:$0xf]
    %v206 = vld [vmem:[#allocation7 + $0x3c] sm:$0xf]
    %v207 = vld [vmem:[#allocation7 + $0x40] sm:$0xf]
    %v208 = vld [vmem:[#allocation7 + $0x44] sm:$0xf]
    %v209 = vld [vmem:[#allocation7 + $0x48] sm:$0xf]
    %v210 = vld [vmem:[#allocation7 + $0x4c] sm:$0xf]
    %v211 = vld [vmem:[#allocation7 + $0x50] sm:$0xf]
    %v212 = vld [vmem:[#allocation7 + $0x54] sm:$0xf]
    %v213 = vld [vmem:[#allocation7 + $0x58] sm:$0xf]
    %v214 = vld [vmem:[#allocation7 + $0x5c] sm:$0xf]
    %v215 = vld [vmem:[#allocation7 + $0x60] sm:$0xf]
    %v216 = vld [vmem:[#allocation7 + $0x64] sm:$0xf]
    %v217 = vld [vmem:[#allocation7 + $0x68] sm:$0xf]
    %v218 = vld [vmem:[#allocation7 + $0x6c] sm:$0xf]
    %v219 = vld [vmem:[#allocation7 + $0x70] sm:$0xf]
    %v220 = vld [vmem:[#allocation7 + $0x74] sm:$0xf]
    %v221 = vld [vmem:[#allocation7 + $0x78] sm:$0xf]
    %v222 = vld [vmem:[#allocation7 + $0x7c] sm:$0xf]
    %v223 = vld [vmem:[%s4] sm:$0x1]
    %v225 = vlaneseq
    %v226 = vshrl.u32 %v225, 7
    %v227 = vsub.s32 0, %v226
    %v228 = vrot.slane %v223, %v227
    %v262 = vunpack.c.l.b16 %v191
    %v263 = vunpack.c.l.b16 %v192
    %v264 = vunpack.c.l.b16 %v193
    %v265 = vunpack.c.l.b16 %v194
    %v266 = vunpack.c.l.b16 %v195
    %v267 = vunpack.c.l.b16 %v196
    %v268 = vunpack.c.l.b16 %v197
    %v269 = vunpack.c.l.b16 %v198
    %v270 = vunpack.c.l.b16 %v199
    %v271 = vunpack.c.l.b16 %v200
    %v272 = vunpack.c.l.b16 %v201
    %v273 = vunpack.c.l.b16 %v202
    %v274 = vunpack.c.l.b16 %v203
    %v275 = vunpack.c.l.b16 %v204
    %v276 = vunpack.c.l.b16 %v205
    %v277 = vunpack.c.l.b16 %v206
    %v278 = vunpack.c.l.b16 %v207
    %v279 = vunpack.c.l.b16 %v208
    %v280 = vunpack.c.l.b16 %v209
    %v281 = vunpack.c.l.b16 %v210
    %v282 = vunpack.c.l.b16 %v211
    %v283 = vunpack.c.l.b16 %v212
    %v284 = vunpack.c.l.b16 %v213
    %v285 = vunpack.c.l.b16 %v214
    %v286 = vunpack.c.l.b16 %v215
    %v287 = vunpack.c.l.b16 %v216
    %v288 = vunpack.c.l.b16 %v217
    %v289 = vunpack.c.l.b16 %v218
    %v290 = vunpack.c.l.b16 %v219
    %v291 = vunpack.c.l.b16 %v220
    %v292 = vunpack.c.l.b16 %v221
    %v293 = vunpack.c.l.b16 %v222
    %v294 = vpack.c.b16 %v263, %v262
    %v295 = vpack.c.b16 %v265, %v264
    %v296 = vpack.c.b16 %v267, %v266
    %v297 = vpack.c.b16 %v269, %v268
    %v298 = vpack.c.b16 %v271, %v270
    %v299 = vpack.c.b16 %v273, %v272
    %v300 = vpack.c.b16 %v275, %v274
    %v301 = vpack.c.b16 %v277, %v276
    %v302 = vpack.c.b16 %v279, %v278
    %v303 = vpack.c.b16 %v281, %v280
    %v304 = vpack.c.b16 %v283, %v282
    %v305 = vpack.c.b16 %v285, %v284
    %v306 = vpack.c.b16 %v287, %v286
    %v307 = vpack.c.b16 %v289, %v288
    %v308 = vpack.c.b16 %v291, %v290
    %v309 = vpack.c.b16 %v293, %v292
    %326 = vmatprep.subr.bf16.mxu0 0
    %327 = vmatpush1.bf16.msra.mxu0 %v301
    %328 = vmatprep.subr.bf16.mxu0 0
    %329 = vmatpush1.bf16.msra.mxu0 %v300
    %330 = vmatprep.subr.bf16.mxu0 0
    %331 = vmatpush1.bf16.msra.mxu0 %v299
    %332 = vmatprep.subr.bf16.mxu0 0
    %333 = vmatpush1.bf16.msra.mxu0 %v298
    %334 = vmatprep.subr.bf16.mxu0 0
    %335 = vmatpush1.bf16.msra.mxu0 %v297
    %336 = vmatprep.subr.bf16.mxu0 0
    %337 = vmatpush1.bf16.msra.mxu0 %v296
    %338 = vmatprep.subr.bf16.mxu0 0
    %339 = vmatpush1.bf16.msra.mxu0 %v295
    %340 = vmatprep.subr.bf16.mxu0 0
    %341 = vmatpush1.bf16.msra.mxu0 %v294
    %342 = vmatprep.subr.bf16.mxu0 0
    %343 = vmatpush2.bf16.msra.mxu0 %v309
    %344 = vmatprep.subr.bf16.mxu0 0
    %345 = vmatpush2.bf16.msra.mxu0 %v308
    %346 = vmatprep.subr.bf16.mxu0 0
    %347 = vmatpush2.bf16.msra.mxu0 %v307
    %348 = vmatprep.subr.bf16.mxu0 0
    %349 = vmatpush2.bf16.msra.mxu0 %v306
    %350 = vmatprep.subr.bf16.mxu0 0
    %351 = vmatpush2.bf16.msra.mxu0 %v305
    %352 = vmatprep.subr.bf16.mxu0 0
    %353 = vmatpush2.bf16.msra.mxu0 %v304
    %354 = vmatprep.subr.bf16.mxu0 0
    %355 = vmatpush2.bf16.msra.mxu0 %v303
    %356 = vmatprep.subr.bf16.mxu0 0
    %357 = vmatpush2.bf16.msra.mxu0 %v302
    %358 = vmatprep.mubr.bf16.mxu0 %v190
    %359 = vmatmul.mubr.bf16.gmra.mxu0 %v189
    %v360 = vpop.f32.mrf.mxu0
    %v361 = vadd.f32 %v228, %v360
    %v362 = vpop.f32.mrf.mxu0
    %v363 = vpop.f32.mrf.mxu0
    %v364 = vpop.f32.mrf.mxu0
    %365 = vdwg.mxu0
    %v366 = vmax.f32 %v361, 0.0
    %v367 = vpack.c.bf16 %v366, %v366
    %v368 = vld [vmem:[#allocation8] sm:$0xf]
    %v369 = vld [vmem:[#allocation8 + $0x4] sm:$0xf]
    %v370 = vld [vmem:[#allocation8 + $0x8] sm:$0xf]
    %v371 = vld [vmem:[#allocation8 + $0xc] sm:$0xf]
    %v372 = vld [vmem:[#allocation8 + $0x10] sm:$0xf]
    %v373 = vld [vmem:[#allocation8 + $0x14] sm:$0xf]
    %v374 = vld [vmem:[#allocation8 + $0x18] sm:$0xf]
    %v375 = vld [vmem:[#allocation8 + $0x1c] sm:$0xf]
    %v376 = vld [vmem:[#allocation8 + $0x20] sm:$0xf]
    %v377 = vld [vmem:[#allocation8 + $0x24] sm:$0xf]
    %v378 = vld [vmem:[#allocation8 + $0x28] sm:$0xf]
    %v379 = vld [vmem:[#allocation8 + $0x2c] sm:$0xf]
    %v380 = vld [vmem:[#allocation8 + $0x30] sm:$0xf]
    %v381 = vld [vmem:[#allocation8 + $0x34] sm:$0xf]
    %v382 = vld [vmem:[#allocation8 + $0x38] sm:$0xf]
    %v383 = vld [vmem:[#allocation8 + $0x3c] sm:$0xf]
    %v384 = vld [vmem:[%s6] sm:$0x1]
    %v386 = vlaneseq
    %v387 = vshrl.u32 %v386, 7
    %v388 = vsub.s32 0, %v387
    %v389 = vrot.slane %v384, %v388
    %v407 = vunpack.c.l.b16 %v368
    %v408 = vunpack.c.l.b16 %v369
    %v409 = vunpack.c.l.b16 %v370
    %v410 = vunpack.c.l.b16 %v371
    %v411 = vunpack.c.l.b16 %v372
    %v412 = vunpack.c.l.b16 %v373
    %v413 = vunpack.c.l.b16 %v374
    %v414 = vunpack.c.l.b16 %v375
    %v415 = vunpack.c.l.b16 %v376
    %v416 = vunpack.c.l.b16 %v377
    %v417 = vunpack.c.l.b16 %v378
    %v418 = vunpack.c.l.b16 %v379
    %v419 = vunpack.c.l.b16 %v380
    %v420 = vunpack.c.l.b16 %v381
    %v421 = vunpack.c.l.b16 %v382
    %v422 = vunpack.c.l.b16 %v383
    %v423 = vpack.c.b16 %v408, %v407
    %v424 = vpack.c.b16 %v410, %v409
    %v425 = vpack.c.b16 %v412, %v411
    %v426 = vpack.c.b16 %v414, %v413
    %v427 = vpack.c.b16 %v416, %v415
    %v428 = vpack.c.b16 %v418, %v417
    %v429 = vpack.c.b16 %v420, %v419
    %v430 = vpack.c.b16 %v422, %v421
    %439 = vmatprep.subr.bf16.mxu0 0
    %440 = vmatpush1.bf16.msra.mxu0 %v430
    %441 = vmatprep.subr.bf16.mxu0 0
    %442 = vmatpush1.bf16.msra.mxu0 %v429
    %443 = vmatprep.subr.bf16.mxu0 0
    %444 = vmatpush1.bf16.msra.mxu0 %v428
    %445 = vmatprep.subr.bf16.mxu0 0
    %446 = vmatpush1.bf16.msra.mxu0 %v427
    %447 = vmatprep.subr.bf16.mxu0 0
    %448 = vmatpush1.bf16.msra.mxu0 %v426
    %449 = vmatprep.subr.bf16.mxu0 0
    %450 = vmatpush1.bf16.msra.mxu0 %v425
    %451 = vmatprep.subr.bf16.mxu0 0
    %452 = vmatpush1.bf16.msra.mxu0 %v424
    %453 = vmatprep.subr.bf16.mxu0 0
    %454 = vmatpush1.bf16.msra.mxu0 %v423
    %455 = vmatprep.subr.bf16.mxu0 0
    %456 = vmatpush2.bf16.msra.mxu0 0
    %457 = vmatprep.subr.bf16.mxu0 0
    %458 = vmatpush2.bf16.msra.mxu0 0
    %459 = vmatprep.subr.bf16.mxu0 0
    %460 = vmatpush2.bf16.msra.mxu0 0
    %461 = vmatprep.subr.bf16.mxu0 0
    %462 = vmatpush2.bf16.msra.mxu0 0
    %463 = vmatprep.subr.bf16.mxu0 0
    %464 = vmatpush2.bf16.msra.mxu0 0
    %465 = vmatprep.subr.bf16.mxu0 0
    %466 = vmatpush2.bf16.msra.mxu0 0
    %467 = vmatprep.subr.bf16.mxu0 0
    %468 = vmatpush2.bf16.msra.mxu0 0
    %469 = vmatprep.subr.bf16.mxu0 0
    %470 = vmatpush2.bf16.msra.mxu0 0
    %471 = vmatprep.mubr.bf16.mxu0 0
    %472 = vmatmul.mubr.bf16.gmra.mxu0 %v367
    %v473 = vpop.f32.mrf.mxu0
    %v474 = vadd.f32 %v389, %v473
    %v475 = vpop.f32.mrf.mxu0
    %v476 = vpop.f32.mrf.mxu0
    %v477 = vpop.f32.mrf.mxu0
    %478 = vdwg.mxu0
    %v479 = vsub.f32 0.0, %v474
    %v480 = vmul.f32 %v479, 1.442695
    %v481 = vpow.pop %v480
    %v482 = vadd.f32 %v481, 1.0
    %v483 = vrcp.pop %v482
    %484 = vst [vmem:[#allocation10] sm:$0xff] %v483
    // Predicated region
    $region46: #{tpu_custom_call.1} parent=1 // pred_check
      _
    $region47: #{tpu_custom_call.1} parent=1 // pred_check_branch
      %486 = sbr.rel (0) target = $region49
    $region48: #{tpu_custom_call.1} parent=1 // pred_region
      %s488 = ssub.s32 128, 128
      %489 = vsyncadd [#allocation4], %s488
      %s491 = sshll.u32 [#allocation10], 4
      %s492 = int_to_ptr.vmem [resolvable:$true] %s491
      %494 = dma.vmem_to_hbm [thread:$0]  %s492, 128, %s7, [#allocation4]
    $region49: #{tpu_custom_call.1} parent=1 // pred_fallthru
      _
    // Predicated region
    $region50: #{tpu_custom_call.1} parent=1 // pred_check
      _
    $region51: #{tpu_custom_call.1} parent=1 // pred_check_branch
      %496 = sbr.rel (0) target = $region53
    $region52: #{tpu_custom_call.1} parent=1 // pred_region
      %497 = dma.done [#allocation4], 128
    $region53: #{tpu_custom_call.1} parent=1 // pred_fallthru
      _
    %498 = vsyncpa [#allocation3], 1
    %499 = vsyncpa [#allocation6], 1
    %500 = vsyncpa [#allocation9], 1
    %501 = vsyncpa [#allocation4], 1

</llo_original>
